<compile_context>
chip_gen: v6e
topology: v6e:2x2x1
jax: 0.10.0
libtpu: 0.0.40
codegen_flags: <defaults>
</compile_context>

<pallas_src>
import functools

import jax
import jax.numpy as jnp
from jax.experimental import pallas as pl
from jax.experimental.pallas import tpu as pltpu

LANE = 128


def mlp_kernel(x_ref, w1_ref, w2_ref, w3_ref, w4_ref, w5_ref, o_ref, *, out_dim):
    def silu(v):
        # v * sigmoid(v) == v * 0.5 * (tanh(v/2) + 1): one transcendental (tanh)
        # instead of exp + reciprocal. Math stays in f32 (v5e-safe).
        return v * (0.5 * jnp.tanh(0.5 * v) + 0.5)

    def dense_silu(h, w_ref):
        return silu(
            jnp.dot(h.astype(jnp.bfloat16), w_ref[...],
                    preferred_element_type=jnp.float32))

    x = x_ref[...]  # bf16 tile [TB, input_dim]
    h = silu(jnp.dot(x, w1_ref[...], preferred_element_type=jnp.float32))
    h = dense_silu(h, w2_ref)
    h = dense_silu(h, w3_ref)
    h = dense_silu(h, w4_ref)

    # Final projection padded to a lane-dense [TB, 128] slab.
    logits = jnp.dot(h.astype(jnp.bfloat16), w5_ref[...],
                     preferred_element_type=jnp.float32)

    # Mask padded lanes (>= out_dim) so softmax over dim=1 only sees real columns.
    col = jax.lax.broadcasted_iota(jnp.int32, logits.shape, dimension=1)
    logits = jnp.where(col < out_dim, logits, -jnp.inf)

    m = jnp.max(logits, axis=-1, keepdims=True)
    e = jnp.exp(logits - m)
    denom = jnp.sum(e, axis=-1, keepdims=True)
    o_ref[...] = (e * pl.reciprocal(denom, approx=True)).astype(o_ref.dtype)


def neural_network_forward(x, w1, w2, w3, w4, w5, *, tb=512):
    """x: [B, input_dim] f32; w_i already transposed to [in, out]."""
    B, input_dim = x.shape
    hidden_dims = (w1.shape[1], w2.shape[1], w3.shape[1], w4.shape[1])
    out_dim = w5.shape[1]

    # bf16 operands: halves HBM traffic and feeds the MXU its native dtype.
    x_bf = x.astype(jnp.bfloat16)
    w1b, w2b, w3b, w4b = (w.astype(jnp.bfloat16) for w in (w1, w2, w3, w4))

    # Lane-dense output: zero-pad the output projection to a multiple of 128.
    out_pad = ((out_dim + LANE - 1) // LANE) * LANE
    w5p = jnp.zeros((w5.shape[0], out_pad), jnp.bfloat16)
    w5p = w5p.at[:, :out_dim].set(w5.astype(jnp.bfloat16))

    # Batch tile: multiple of 8 sublanes, capped so tiles + double buffers stay
    # far under the scoped-VMEM budget on every generation (incl. v7x 64 MiB).
    tb = max(8, min(tb, ((B + 7) // 8) * 8))
    b_pad = ((B + tb - 1) // tb) * tb
    if b_pad != B:
        x_bf = jnp.pad(x_bf, ((0, b_pad - B), (0, 0)))

    grid = (b_pad // tb,)

    flops = 2 * b_pad * (input_dim * hidden_dims[0]
                         + hidden_dims[0] * hidden_dims[1]
                         + hidden_dims[1] * hidden_dims[2]
                         + hidden_dims[2] * hidden_dims[3]
                         + hidden_dims[3] * out_dim)
    transcendentals = b_pad * (sum(hidden_dims) + out_dim)
    bytes_accessed = (x_bf.size * x_bf.dtype.itemsize
                      + sum(w.size * w.dtype.itemsize
                            for w in (w1b, w2b, w3b, w4b, w5p))
                      + b_pad * out_pad * 4)

    kernel = functools.partial(mlp_kernel, out_dim=out_dim)

    out = pl.pallas_call(
        kernel,
        out_shape=jax.ShapeDtypeStruct((b_pad, out_pad), jnp.float32),
        grid=grid,
        in_specs=[
            pl.BlockSpec((tb, input_dim), lambda i: (i, 0)),   # x tile (pipelined)
            pl.BlockSpec(w1b.shape, lambda i: (0, 0)),         # weights: constant blocks
            pl.BlockSpec(w2b.shape, lambda i: (0, 0)),
            pl.BlockSpec(w3b.shape, lambda i: (0, 0)),
            pl.BlockSpec(w4b.shape, lambda i: (0, 0)),
            pl.BlockSpec(w5p.shape, lambda i: (0, 0)),
        ],
        out_specs=pl.BlockSpec((tb, out_pad), lambda i: (i, 0)),
        compiler_params=pltpu.CompilerParams(
            dimension_semantics=("parallel",),
            vmem_limit_bytes=32 << 20,
        ),
        cost_estimate=pl.CostEstimate(
            flops=flops,
            transcendentals=transcendentals,
            bytes_accessed=bytes_accessed,
        ),
    )(x_bf, w1b, w2b, w3b, w4b, w5p)

    return out[:B, :out_dim]


def _reference(x, w1, w2, w3, w4, w5):
    # Pure-JAX reference using the same bf16-rounded operands the kernel sees.
    f32 = lambda a: a.astype(jnp.bfloat16).astype(jnp.float32)
    silu = lambda v: v * jax.nn.sigmoid(v)
    h = silu(f32(x) @ f32(w1))
    h = silu(h @ f32(w2))
    h = silu(h @ f32(w3))
    h = silu(h @ f32(w4))
    return jax.nn.softmax(h @ f32(w5), axis=1)


if __name__ == "__main__":
    # Small shapes consistent with the module's forward: x is [B, input_dim].
    B, input_dim, hidden_dim, output_dim = 8, 16, 32, 8

    key = jax.random.PRNGKey(0)
    kx, k1, k2, k3, k4, k5 = jax.random.split(key, 6)

    x = jax.random.normal(kx, (B, input_dim), dtype=jnp.float32)

    # nn.Linear(in, out, bias=False) stores weight as [out, in]; we build the
    # transposed [in, out] version directly (deterministic 1/sqrt(fan_in) init).
    def init_w(k, fan_in, fan_out):
        bound = 1.0 / jnp.sqrt(fan_in)
        return jax.random.uniform(
            k, (fan_in, fan_out), dtype=jnp.float32, minval=-bound, maxval=bound)

    w1 = init_w(k1, input_dim, hidden_dim)
    w2 = init_w(k2, hidden_dim, hidden_dim)
    w3 = init_w(k3, hidden_dim, hidden_dim)
    w4 = init_w(k4, hidden_dim, hidden_dim)
    w5 = init_w(k5, hidden_dim, output_dim)

    out = neural_network_forward(x, w1, w2, w3, w4, w5)
    out = jax.block_until_ready(out)

    ref = _reference(x, w1, w2, w3, w4, w5)
    assert out.shape == (B, output_dim)
    # bf16 MXU operands + approx EUP reciprocal => slightly relaxed tolerance.
    assert jnp.allclose(out, ref, atol=5e-3, rtol=5e-3), "mismatch vs reference"
    assert jnp.allclose(jnp.sum(out, axis=1), 1.0, atol=1e-2), "softmax rows must sum to 1"

    print("KERNEL_OK")
</pallas_src>

<mosaic_0001>
module attributes {stable_mosaic.version = 11 : i64} {
  func.func @mlp_kernel(%arg0: i32, %arg1: memref<8x16xbf16, #tpu.memory_space<vmem>>, %arg2: memref<16x32xbf16, #tpu.memory_space<vmem>>, %arg3: memref<32x32xbf16, #tpu.memory_space<vmem>>, %arg4: memref<32x32xbf16, #tpu.memory_space<vmem>>, %arg5: memref<32x32xbf16, #tpu.memory_space<vmem>>, %arg6: memref<32x128xbf16, #tpu.memory_space<vmem>>, %arg7: memref<8x128xf32, #tpu.memory_space<vmem>>) attributes {dimension_semantics = [#tpu.dimension_semantics<parallel>], iteration_bounds = array<i64: 1>, scalar_prefetch = 0 : i64, scratch_operands = 0 : i64, tpu.core_type = #tpu.core_type<tc>, window_params = [{transform_indices = @transform_0, window_bounds = array<i64: 8, 16>}, {pipeline_mode = #tpu.pipeline_mode<synchronous>, transform_indices = @transform_1, window_bounds = array<i64: 16, 32>}, {pipeline_mode = #tpu.pipeline_mode<synchronous>, transform_indices = @transform_2, window_bounds = array<i64: 32, 32>}, {pipeline_mode = #tpu.pipeline_mode<synchronous>, transform_indices = @transform_3, window_bounds = array<i64: 32, 32>}, {pipeline_mode = #tpu.pipeline_mode<synchronous>, transform_indices = @transform_4, window_bounds = array<i64: 32, 32>}, {pipeline_mode = #tpu.pipeline_mode<synchronous>, transform_indices = @transform_5, window_bounds = array<i64: 32, 128>}, {transform_indices = @transform_6, window_bounds = array<i64: 8, 128>}]} {
    %c0 = arith.constant 0 : index
    %c0_0 = arith.constant 0 : index
    %0 = vector.load %arg1[%c0, %c0_0] : memref<8x16xbf16, #tpu.memory_space<vmem>>, vector<8x16xbf16>
    %c0_1 = arith.constant 0 : index
    %c0_2 = arith.constant 0 : index
    %1 = vector.load %arg2[%c0_1, %c0_2] : memref<16x32xbf16, #tpu.memory_space<vmem>>, vector<16x32xbf16>
    %cst = arith.constant dense<0.000000e+00> : vector<8x32xf32>
    %2 = tpu.matmul %0, %1, %cst {dimension_numbers = #tpu.dot_dimension_numbers<[1], [0], [0], [1], [0, 0, 1, 1], [], []>} : vector<8x16xbf16>, vector<16x32xbf16>, vector<8x32xf32> -> vector<8x32xf32>
    %cst_3 = arith.constant 5.000000e-01 : f32
    %3 = vector.broadcast %cst_3 : f32 to vector<8x32xf32>
    %4 = arith.mulf %3, %2 : vector<8x32xf32>
    %5 = math.tanh %4 : vector<8x32xf32>
    %cst_4 = arith.constant 5.000000e-01 : f32
    %6 = vector.broadcast %cst_4 : f32 to vector<8x32xf32>
    %7 = arith.mulf %6, %5 : vector<8x32xf32>
    %cst_5 = arith.constant 5.000000e-01 : f32
    %8 = vector.broadcast %cst_5 : f32 to vector<8x32xf32>
    %9 = arith.addf %7, %8 : vector<8x32xf32>
    %10 = arith.mulf %2, %9 : vector<8x32xf32>
    %11 = arith.truncf %10 : vector<8x32xf32> to vector<8x32xbf16>
    %c0_6 = arith.constant 0 : index
    %c0_7 = arith.constant 0 : index
    %12 = vector.load %arg3[%c0_6, %c0_7] : memref<32x32xbf16, #tpu.memory_space<vmem>>, vector<32x32xbf16>
    %cst_8 = arith.constant dense<0.000000e+00> : vector<8x32xf32>
    %13 = tpu.matmul %11, %12, %cst_8 {dimension_numbers = #tpu.dot_dimension_numbers<[1], [0], [0], [1], [0, 0, 1, 1], [], []>} : vector<8x32xbf16>, vector<32x32xbf16>, vector<8x32xf32> -> vector<8x32xf32>
    %cst_9 = arith.constant 5.000000e-01 : f32
    %14 = vector.broadcast %cst_9 : f32 to vector<8x32xf32>
    %15 = arith.mulf %14, %13 : vector<8x32xf32>
    %16 = math.tanh %15 : vector<8x32xf32>
    %cst_10 = arith.constant 5.000000e-01 : f32
    %17 = vector.broadcast %cst_10 : f32 to vector<8x32xf32>
    %18 = arith.mulf %17, %16 : vector<8x32xf32>
    %cst_11 = arith.constant 5.000000e-01 : f32
    %19 = vector.broadcast %cst_11 : f32 to vector<8x32xf32>
    %20 = arith.addf %18, %19 : vector<8x32xf32>
    %21 = arith.mulf %13, %20 : vector<8x32xf32>
    %22 = arith.truncf %21 : vector<8x32xf32> to vector<8x32xbf16>
    %c0_12 = arith.constant 0 : index
    %c0_13 = arith.constant 0 : index
    %23 = vector.load %arg4[%c0_12, %c0_13] : memref<32x32xbf16, #tpu.memory_space<vmem>>, vector<32x32xbf16>
    %cst_14 = arith.constant dense<0.000000e+00> : vector<8x32xf32>
    %24 = tpu.matmul %22, %23, %cst_14 {dimension_numbers = #tpu.dot_dimension_numbers<[1], [0], [0], [1], [0, 0, 1, 1], [], []>} : vector<8x32xbf16>, vector<32x32xbf16>, vector<8x32xf32> -> vector<8x32xf32>
    %cst_15 = arith.constant 5.000000e-01 : f32
    %25 = vector.broadcast %cst_15 : f32 to vector<8x32xf32>
    %26 = arith.mulf %25, %24 : vector<8x32xf32>
    %27 = math.tanh %26 : vector<8x32xf32>
    %cst_16 = arith.constant 5.000000e-01 : f32
    %28 = vector.broadcast %cst_16 : f32 to vector<8x32xf32>
    %29 = arith.mulf %28, %27 : vector<8x32xf32>
    %cst_17 = arith.constant 5.000000e-01 : f32
    %30 = vector.broadcast %cst_17 : f32 to vector<8x32xf32>
    %31 = arith.addf %29, %30 : vector<8x32xf32>
    %32 = arith.mulf %24, %31 : vector<8x32xf32>
    %33 = arith.truncf %32 : vector<8x32xf32> to vector<8x32xbf16>
    %c0_18 = arith.constant 0 : index
    %c0_19 = arith.constant 0 : index
    %34 = vector.load %arg5[%c0_18, %c0_19] : memref<32x32xbf16, #tpu.memory_space<vmem>>, vector<32x32xbf16>
    %cst_20 = arith.constant dense<0.000000e+00> : vector<8x32xf32>
    %35 = tpu.matmul %33, %34, %cst_20 {dimension_numbers = #tpu.dot_dimension_numbers<[1], [0], [0], [1], [0, 0, 1, 1], [], []>} : vector<8x32xbf16>, vector<32x32xbf16>, vector<8x32xf32> -> vector<8x32xf32>
    %cst_21 = arith.constant 5.000000e-01 : f32
    %36 = vector.broadcast %cst_21 : f32 to vector<8x32xf32>
    %37 = arith.mulf %36, %35 : vector<8x32xf32>
    %38 = math.tanh %37 : vector<8x32xf32>
    %cst_22 = arith.constant 5.000000e-01 : f32
    %39 = vector.broadcast %cst_22 : f32 to vector<8x32xf32>
    %40 = arith.mulf %39, %38 : vector<8x32xf32>
    %cst_23 = arith.constant 5.000000e-01 : f32
    %41 = vector.broadcast %cst_23 : f32 to vector<8x32xf32>
    %42 = arith.addf %40, %41 : vector<8x32xf32>
    %43 = arith.mulf %35, %42 : vector<8x32xf32>
    %44 = arith.truncf %43 : vector<8x32xf32> to vector<8x32xbf16>
    %c0_24 = arith.constant 0 : index
    %c0_25 = arith.constant 0 : index
    %45 = vector.load %arg6[%c0_24, %c0_25] : memref<32x128xbf16, #tpu.memory_space<vmem>>, vector<32x128xbf16>
    %cst_26 = arith.constant dense<0.000000e+00> : vector<8x128xf32>
    %46 = tpu.matmul %44, %45, %cst_26 {dimension_numbers = #tpu.dot_dimension_numbers<[1], [0], [0], [1], [0, 0, 1, 1], [], []>} : vector<8x32xbf16>, vector<32x128xbf16>, vector<8x128xf32> -> vector<8x128xf32>
    %47 = tpu.iota {dimensions = array<i32: 1>} : vector<8x128xi32>
    %c8_i32 = arith.constant 8 : i32
    %48 = vector.broadcast %c8_i32 : i32 to vector<8x128xi32>
    %49 = arith.cmpi slt, %47, %48 : vector<8x128xi32>
    %cst_27 = arith.constant 0xFF800000 : f32
    %50 = vector.broadcast %cst_27 : f32 to vector<8x128xf32>
    %51 = arith.select %49, %46, %50 : vector<8x128xi1>, vector<8x128xf32>
    %cst_28 = arith.constant dense<0xFF800000> : vector<8xf32>
    %52 = vector.multi_reduction <maximumf>, %51, %cst_28 [1] : vector<8x128xf32> to vector<8xf32>
    %53 = vector.shape_cast %52 : vector<8xf32> to vector<8x1xf32>
    %54 = vector.broadcast %53 : vector<8x1xf32> to vector<8x128xf32>
    %55 = arith.subf %51, %54 : vector<8x128xf32>
    %56 = math.exp %55 : vector<8x128xf32>
    %cst_29 = arith.constant dense<0.000000e+00> : vector<8xf32>
    %57 = vector.multi_reduction <add>, %56, %cst_29 [1] : vector<8x128xf32> to vector<8xf32>
    %58 = vector.shape_cast %57 : vector<8xf32> to vector<8x1xf32>
    %59 = tpu.reciprocal %58 {approx = true} : vector<8x1xf32> -> vector<8x1xf32>
    %60 = vector.broadcast %59 : vector<8x1xf32> to vector<8x128xf32>
    %61 = arith.mulf %56, %60 : vector<8x128xf32>
    %c0_30 = arith.constant 0 : index
    %c0_31 = arith.constant 0 : index
    %62 = vector.load %arg7[%c0_30, %c0_31] : memref<8x128xf32, #tpu.memory_space<vmem>>, vector<8x128xf32>
    tpu.vector_store %arg7[%c0_30, %c0_31], %61 {strides = array<i32>} : memref<8x128xf32, #tpu.memory_space<vmem>>, vector<8x128xf32>,
    return
  }
  func.func @transform_0(%arg0: i32) -> (i32, i32) {
    %c0_i32 = arith.constant 0 : i32
    %c0_i32_0 = arith.constant 0 : i32
    return %arg0, %c0_i32 : i32, i32
  }
  func.func @transform_1(%arg0: i32) -> (i32, i32) {
    %c0_i32 = arith.constant 0 : i32
    %c0_i32_0 = arith.constant 0 : i32
    %c0_i32_1 = arith.constant 0 : i32
    return %c0_i32, %c0_i32_0 : i32, i32
  }
  func.func @transform_2(%arg0: i32) -> (i32, i32) {
    %c0_i32 = arith.constant 0 : i32
    %c0_i32_0 = arith.constant 0 : i32
    %c0_i32_1 = arith.constant 0 : i32
    return %c0_i32, %c0_i32_0 : i32, i32
  }
  func.func @transform_3(%arg0: i32) -> (i32, i32) {
    %c0_i32 = arith.constant 0 : i32
    %c0_i32_0 = arith.constant 0 : i32
    %c0_i32_1 = arith.constant 0 : i32
    return %c0_i32, %c0_i32_0 : i32, i32
  }
  func.func @transform_4(%arg0: i32) -> (i32, i32) {
    %c0_i32 = arith.constant 0 : i32
    %c0_i32_0 = arith.constant 0 : i32
    %c0_i32_1 = arith.constant 0 : i32
    return %c0_i32, %c0_i32_0 : i32, i32
  }
  func.func @transform_5(%arg0: i32) -> (i32, i32) {
    %c0_i32 = arith.constant 0 : i32
    %c0_i32_0 = arith.constant 0 : i32
    %c0_i32_1 = arith.constant 0 : i32
    return %c0_i32, %c0_i32_0 : i32, i32
  }
  func.func @transform_6(%arg0: i32) -> (i32, i32) {
    %c0_i32 = arith.constant 0 : i32
    %c0_i32_0 = arith.constant 0 : i32
    return %arg0, %c0_i32 : i32, i32
  }
}

</mosaic_0001>

<llo_original>
// kernel: tpu_custom_call.1
$region0: #{tpu_custom_call.1}
  #allocation0 [shape = 'u32[]', space=smem, size = 0x4, offset = 0x4, fixed_abs, tag = 'smem constant byte address 0x4 - core index']
  #allocation1 [shape = 'u32[144,128]{1,0:T(1,128)}', space=vmem, size = 0x12000, scoped, tag = 'internal scratch']
  %s0 = inlined_call_operand.hbm [shape: bf16[8,16], index: 0, kind: input, shape index: {}]
  %s1 = inlined_call_operand.hbm [shape: bf16[16,32], index: 1, kind: input, shape index: {}]
  %s2 = inlined_call_operand.hbm [shape: bf16[32,32], index: 2, kind: input, shape index: {}]
  %s3 = inlined_call_operand.hbm [shape: bf16[32,32], index: 3, kind: input, shape index: {}]
  %s4 = inlined_call_operand.hbm [shape: bf16[32,32], index: 4, kind: input, shape index: {}]
  %s5 = inlined_call_operand.hbm [shape: bf16[32,128], index: 5, kind: input, shape index: {}]
  %s6 = inlined_call_operand.hbm [shape: f32[8,128], index: 6, kind: output, shape index: {}]
  %s7 = sld [smem:[#allocation0]]
  $region58: #{tpu_custom_call.1} parent=0
    _
  %s9 = ssub.s32 1, %s7
  %s10 = scalar_select 0, %s9, %s7
  $region1: #{tpu_custom_call.1} parent=0
    #allocation2 [shape = 'u8[2048]{0}', space=vmem, size = 0x800, scoped, tag = 'input window, operand 0, single buffered']
    #allocation3 [shape = 's32[1]{0}', space=sflag, size = 0x4, scoped, tag = 'scoped memory for tpu_custom_call.1']
    #allocation4 [shape = 's32[1]{0}', space=sflag, size = 0x4, scoped, tag = 'scoped memory for tpu_custom_call.1']
    #allocation5 [shape = 'u8[4096]{0}', space=vmem, size = 0x1000, scoped, tag = 'input window, operand 1, single buffered']
    #allocation6 [shape = 's32[1]{0}', space=sflag, size = 0x4, scoped, tag = 'scoped memory for tpu_custom_call.1']
    #allocation7 [shape = 'u8[8192]{0}', space=vmem, size = 0x2000, scoped, tag = 'input window, operand 2, single buffered']
    #allocation8 [shape = 'u8[8192]{0}', space=vmem, size = 0x2000, scoped, tag = 'input window, operand 3, single buffered']
    #allocation9 [shape = 's32[1]{0}', space=sflag, size = 0x4, scoped, tag = 'scoped memory for tpu_custom_call.1']
    #allocation10 [shape = 'u8[8192]{0}', space=vmem, size = 0x2000, scoped, tag = 'input window, operand 4, single buffered']
    #allocation11 [shape = 'u8[8192]{0}', space=vmem, size = 0x2000, scoped, tag = 'input window, operand 5, single buffered']
    #allocation12 [shape = 's32[1]{0}', space=sflag, size = 0x4, scoped, tag = 'scoped memory for tpu_custom_call.1']
    #allocation13 [shape = 'u8[4096]{0}', space=vmem, size = 0x1000, scoped, tag = 'output window, operand 0, single buffered']
    %11 = vsyncpa [#allocation3], 0
    %12 = vsyncpa [#allocation6], 0
    %13 = vsyncpa [#allocation9], 0
    %14 = vsyncpa [#allocation12], 0
    %15 = vsyncpa [#allocation4], 0
    // Predicated region
    $region2: #{tpu_custom_call.1} parent=1 // pred_check
      _
    $region3: #{tpu_custom_call.1} parent=1 // pred_check_branch
      %17 = sbr.rel (0) target = $region5
    $region4: #{tpu_custom_call.1} parent=1 // pred_region
      %s19 = ssub.s32 64, 64
      %20 = vsyncadd [#allocation3], %s19
      %s22 = sshll.u32 [#allocation2], 4
      %s23 = int_to_ptr.vmem [resolvable:$true] %s22
      %25 = dma.hbm_to_vmem [thread:$0]  %s0, 64, %s23, [#allocation3]
    $region5: #{tpu_custom_call.1} parent=1 // pred_fallthru
      _
    // Predicated region
    $region6: #{tpu_custom_call.1} parent=1 // pred_check
      _
    $region7: #{tpu_custom_call.1} parent=1 // pred_check_branch
      %27 = sbr.rel (0) target = $region9
    $region8: #{tpu_custom_call.1} parent=1 // pred_region
      %s29 = ssub.s32 128, 128
      %30 = vsyncadd [#allocation6], %s29
      %s31 = sshll.u32 [#allocation5], 4
      %s32 = int_to_ptr.vmem [resolvable:$true] %s31
      %37 = dma.hbm_to_vmem [thread:$0]  %s1, 128, %s32, [#allocation6], 64, 64, 4
    $region9: #{tpu_custom_call.1} parent=1 // pred_fallthru
      _
    // Predicated region
    $region10: #{tpu_custom_call.1} parent=1 // pred_check
      _
    $region11: #{tpu_custom_call.1} parent=1 // pred_check_branch
      %39 = sbr.rel (0) target = $region13
    $region12: #{tpu_custom_call.1} parent=1 // pred_region
      %s41 = ssub.s32 256, 256
      %42 = vsyncadd [#allocation6], %s41
      %s43 = sshll.u32 [#allocation7], 4
      %s44 = int_to_ptr.vmem [resolvable:$true] %s43
      %49 = dma.hbm_to_vmem [thread:$0]  %s2, 256, %s44, [#allocation6], 64, 64, 4
    $region13: #{tpu_custom_call.1} parent=1 // pred_fallthru
      _
    // Predicated region
    $region14: #{tpu_custom_call.1} parent=1 // pred_check
      _
    $region15: #{tpu_custom_call.1} parent=1 // pred_check_branch
      %51 = sbr.rel (0) target = $region17
    $region16: #{tpu_custom_call.1} parent=1 // pred_region
      %s53 = ssub.s32 256, 256
      %54 = vsyncadd [#allocation9], %s53
      %s55 = sshll.u32 [#allocation8], 4
      %s56 = int_to_ptr.vmem [resolvable:$true] %s55
      %61 = dma.hbm_to_vmem [thread:$0]  %s3, 256, %s56, [#allocation9], 64, 64, 4
    $region17: #{tpu_custom_call.1} parent=1 // pred_fallthru
      _
    // Predicated region
    $region18: #{tpu_custom_call.1} parent=1 // pred_check
      _
    $region19: #{tpu_custom_call.1} parent=1 // pred_check_branch
      %63 = sbr.rel (0) target = $region21
    $region20: #{tpu_custom_call.1} parent=1 // pred_region
      %s65 = ssub.s32 256, 256
      %66 = vsyncadd [#allocation9], %s65
      %s67 = sshll.u32 [#allocation10], 4
      %s68 = int_to_ptr.vmem [resolvable:$true] %s67
      %73 = dma.hbm_to_vmem [thread:$0]  %s4, 256, %s68, [#allocation9], 64, 64, 4
    $region21: #{tpu_custom_call.1} parent=1 // pred_fallthru
      _
    // Predicated region
    $region22: #{tpu_custom_call.1} parent=1 // pred_check
      _
    $region23: #{tpu_custom_call.1} parent=1 // pred_check_branch
      %75 = sbr.rel (0) target = $region25
    $region24: #{tpu_custom_call.1} parent=1 // pred_region
      %s77 = ssub.s32 256, 256
      %78 = vsyncadd [#allocation12], %s77
      %s79 = sshll.u32 [#allocation11], 4
      %s80 = int_to_ptr.vmem [resolvable:$true] %s79
      %85 = dma.hbm_to_vmem [thread:$0]  %s5, 256, %s80, [#allocation12], 64, 64, 4
    $region25: #{tpu_custom_call.1} parent=1 // pred_fallthru
      _
    // Predicated region
    $region26: #{tpu_custom_call.1} parent=1 // pred_check
      _
    $region27: #{tpu_custom_call.1} parent=1 // pred_check_branch
      %87 = sbr.rel (0) target = $region29
    $region28: #{tpu_custom_call.1} parent=1 // pred_region
      %88 = dma.done [#allocation3], 64
    $region29: #{tpu_custom_call.1} parent=1 // pred_fallthru
      _
    // Predicated region
    $region30: #{tpu_custom_call.1} parent=1 // pred_check
      _
    $region31: #{tpu_custom_call.1} parent=1 // pred_check_branch
      %90 = sbr.rel (0) target = $region33
    $region32: #{tpu_custom_call.1} parent=1 // pred_region
      %91 = dma.done [#allocation6], 128
    $region33: #{tpu_custom_call.1} parent=1 // pred_fallthru
      _
    // Predicated region
    $region34: #{tpu_custom_call.1} parent=1 // pred_check
      _
    $region35: #{tpu_custom_call.1} parent=1 // pred_check_branch
      %93 = sbr.rel (0) target = $region37
    $region36: #{tpu_custom_call.1} parent=1 // pred_region
      %94 = dma.done [#allocation6], 256
    $region37: #{tpu_custom_call.1} parent=1 // pred_fallthru
      _
    // Predicated region
    $region38: #{tpu_custom_call.1} parent=1 // pred_check
      _
    $region39: #{tpu_custom_call.1} parent=1 // pred_check_branch
      %96 = sbr.rel (0) target = $region41
    $region40: #{tpu_custom_call.1} parent=1 // pred_region
      %97 = dma.done [#allocation9], 256
    $region41: #{tpu_custom_call.1} parent=1 // pred_fallthru
      _
    // Predicated region
    $region42: #{tpu_custom_call.1} parent=1 // pred_check
      _
    $region43: #{tpu_custom_call.1} parent=1 // pred_check_branch
      %99 = sbr.rel (0) target = $region45
    $region44: #{tpu_custom_call.1} parent=1 // pred_region
      %100 = dma.done [#allocation9], 256
    $region45: #{tpu_custom_call.1} parent=1 // pred_fallthru
      _
    // Predicated region
    $region46: #{tpu_custom_call.1} parent=1 // pred_check
      _
    $region47: #{tpu_custom_call.1} parent=1 // pred_check_branch
      %102 = sbr.rel (0) target = $region49
    $region48: #{tpu_custom_call.1} parent=1 // pred_region
      %103 = dma.done [#allocation12], 256
    $region49: #{tpu_custom_call.1} parent=1 // pred_fallthru
      _
    %v105 = vld [vmem:[#allocation2] sm:$0xf]
    %v106 = vld [vmem:[#allocation5] sm:$0xf]
    %v107 = vld [vmem:[#allocation5 + $0x4] sm:$0xf]
    %v110 = vunpack.c.l.b16 %v106
    %v111 = vunpack.c.l.b16 %v107
    %v112 = vpack.c.b16 %v111, %v110
    %vm114 = vcmask 130048
    %v116 = vsel %vm114, %v105, 0
    %118 = vmatprep.subr.bf16.mxu0 0
    %119 = vmatpush1.bf16.msra.mxu0 0
    %120 = vmatprep.subr.bf16.mxu0 0
    %121 = vmatpush1.bf16.msra.mxu0 0
    %122 = vmatprep.subr.bf16.mxu0 0
    %123 = vmatpush1.bf16.msra.mxu0 0
    %124 = vmatprep.subr.bf16.mxu0 0
    %125 = vmatpush1.bf16.msra.mxu0 0
    %126 = vmatprep.subr.bf16.mxu0 0
    %127 = vmatpush1.bf16.msra.mxu0 0
    %128 = vmatprep.subr.bf16.mxu0 0
    %129 = vmatpush1.bf16.msra.mxu0 0
    %130 = vmatprep.subr.bf16.mxu0 0
    %131 = vmatpush1.bf16.msra.mxu0 0
    %132 = vmatprep.subr.bf16.mxu0 0
    %133 = vmatpush1.bf16.msra.mxu0 %v112
    %134 = vmatprep.subr.bf16.mxu0 0
    %135 = vmatpush2.bf16.msra.mxu0 0
    %136 = vmatprep.subr.bf16.mxu0 0
    %137 = vmatpush2.bf16.msra.mxu0 0
    %138 = vmatprep.subr.bf16.mxu0 0
    %139 = vmatpush2.bf16.msra.mxu0 0
    %140 = vmatprep.subr.bf16.mxu0 0
    %141 = vmatpush2.bf16.msra.mxu0 0
    %142 = vmatprep.subr.bf16.mxu0 0
    %143 = vmatpush2.bf16.msra.mxu0 0
    %144 = vmatprep.subr.bf16.mxu0 0
    %145 = vmatpush2.bf16.msra.mxu0 0
    %146 = vmatprep.subr.bf16.mxu0 0
    %147 = vmatpush2.bf16.msra.mxu0 0
    %148 = vmatprep.subr.bf16.mxu0 0
    %149 = vmatpush2.bf16.msra.mxu0 0
    %150 = vmatprep.mubr.bf16.mxu0 0
    %151 = vmatmul.mubr.bf16.gmra.mxu0 %v116
    %v152 = vpop.f32.mrf.mxu0
    %v153 = vadd.f32 0.0, %v152
    %v154 = vpop.f32.mrf.mxu0
    %v155 = vpop.f32.mrf.mxu0
    %v156 = vpop.f32.mrf.mxu0
    %157 = vdwg.mxu0
    %v158 = vmul.f32 %v153, 0.5
    %v159 = vtanh.pop %v158
    %v160 = vmul.f32 %v159, 0.5
    %v161 = vadd.f32 %v160, 0.5
    %v162 = vmul.f32 %v153, %v161
    %v163 = vpack.c.bf16 %v162, %v162
    %v164 = vld [vmem:[#allocation7] sm:$0xf]
    %v165 = vld [vmem:[#allocation7 + $0x4] sm:$0xf]
    %v166 = vld [vmem:[#allocation7 + $0x8] sm:$0xf]
    %v167 = vld [vmem:[#allocation7 + $0xc] sm:$0xf]
    %v172 = vunpack.c.l.b16 %v164
    %v173 = vunpack.c.l.b16 %v165
    %v174 = vunpack.c.l.b16 %v166
    %v175 = vunpack.c.l.b16 %v167
    %v176 = vpack.c.b16 %v173, %v172
    %v177 = vpack.c.b16 %v175, %v174
    %vm180 = vcmask 261120
    %v182 = vsel %vm180, %v163, 0
    %184 = vmatprep.subr.bf16.mxu0 0
    %185 = vmatpush1.bf16.msra.mxu0 0
    %186 = vmatprep.subr.bf16.mxu0 0
    %187 = vmatpush1.bf16.msra.mxu0 0
    %188 = vmatprep.subr.bf16.mxu0 0
    %189 = vmatpush1.bf16.msra.mxu0 0
    %190 = vmatprep.subr.bf16.mxu0 0
    %191 = vmatpush1.bf16.msra.mxu0 0
    %192 = vmatprep.subr.bf16.mxu0 0
    %193 = vmatpush1.bf16.msra.mxu0 0
    %194 = vmatprep.subr.bf16.mxu0 0
    %195 = vmatpush1.bf16.msra.mxu0 0
    %196 = vmatprep.subr.bf16.mxu0 0
    %197 = vmatpush1.bf16.msra.mxu0 %v177
    %198 = vmatprep.subr.bf16.mxu0 0
    %199 = vmatpush1.bf16.msra.mxu0 %v176
    %200 = vmatprep.subr.bf16.mxu0 0
    %201 = vmatpush2.bf16.msra.mxu0 0
    %202 = vmatprep.subr.bf16.mxu0 0
    %203 = vmatpush2.bf16.msra.mxu0 0
    %204 = vmatprep.subr.bf16.mxu0 0
    %205 = vmatpush2.bf16.msra.mxu0 0
    %206 = vmatprep.subr.bf16.mxu0 0
    %207 = vmatpush2.bf16.msra.mxu0 0
    %208 = vmatprep.subr.bf16.mxu0 0
    %209 = vmatpush2.bf16.msra.mxu0 0
    %210 = vmatprep.subr.bf16.mxu0 0
    %211 = vmatpush2.bf16.msra.mxu0 0
    %212 = vmatprep.subr.bf16.mxu0 0
    %213 = vmatpush2.bf16.msra.mxu0 0
    %214 = vmatprep.subr.bf16.mxu0 0
    %215 = vmatpush2.bf16.msra.mxu0 0
    %216 = vmatprep.mubr.bf16.mxu0 0
    %217 = vmatmul.mubr.bf16.gmra.mxu0 %v182
    %v218 = vpop.f32.mrf.mxu0
    %v219 = vadd.f32 0.0, %v218
    %v220 = vpop.f32.mrf.mxu0
    %v221 = vpop.f32.mrf.mxu0
    %v222 = vpop.f32.mrf.mxu0
    %223 = vdwg.mxu0
    %v224 = vmul.f32 %v219, 0.5
    %v225 = vtanh.pop %v224
    %v226 = vmul.f32 %v225, 0.5
    %v227 = vadd.f32 %v226, 0.5
    %v228 = vmul.f32 %v219, %v227
    %v229 = vpack.c.bf16 %v228, %v228
    %v230 = vld [vmem:[#allocation8] sm:$0xf]
    %v231 = vld [vmem:[#allocation8 + $0x4] sm:$0xf]
    %v232 = vld [vmem:[#allocation8 + $0x8] sm:$0xf]
    %v233 = vld [vmem:[#allocation8 + $0xc] sm:$0xf]
    %v238 = vunpack.c.l.b16 %v230
    %v239 = vunpack.c.l.b16 %v231
    %v240 = vunpack.c.l.b16 %v232
    %v241 = vunpack.c.l.b16 %v233
    %v242 = vpack.c.b16 %v239, %v238
    %v243 = vpack.c.b16 %v241, %v240
    %v247 = vsel %vm180, %v229, 0
    %249 = vmatprep.subr.bf16.mxu0 0
    %250 = vmatpush1.bf16.msra.mxu0 0
    %251 = vmatprep.subr.bf16.mxu0 0
    %252 = vmatpush1.bf16.msra.mxu0 0
    %253 = vmatprep.subr.bf16.mxu0 0
    %254 = vmatpush1.bf16.msra.mxu0 0
    %255 = vmatprep.subr.bf16.mxu0 0
    %256 = vmatpush1.bf16.msra.mxu0 0
    %257 = vmatprep.subr.bf16.mxu0 0
    %258 = vmatpush1.bf16.msra.mxu0 0
    %259 = vmatprep.subr.bf16.mxu0 0
    %260 = vmatpush1.bf16.msra.mxu0 0
    %261 = vmatprep.subr.bf16.mxu0 0
    %262 = vmatpush1.bf16.msra.mxu0 %v243
    %263 = vmatprep.subr.bf16.mxu0 0
    %264 = vmatpush1.bf16.msra.mxu0 %v242
    %265 = vmatprep.subr.bf16.mxu0 0
    %266 = vmatpush2.bf16.msra.mxu0 0
    %267 = vmatprep.subr.bf16.mxu0 0
    %268 = vmatpush2.bf16.msra.mxu0 0
    %269 = vmatprep.subr.bf16.mxu0 0
    %270 = vmatpush2.bf16.msra.mxu0 0
    %271 = vmatprep.subr.bf16.mxu0 0
    %272 = vmatpush2.bf16.msra.mxu0 0
    %273 = vmatprep.subr.bf16.mxu0 0
    %274 = vmatpush2.bf16.msra.mxu0 0
    %275 = vmatprep.subr.bf16.mxu0 0
    %276 = vmatpush2.bf16.msra.mxu0 0
    %277 = vmatprep.subr.bf16.mxu0 0
    %278 = vmatpush2.bf16.msra.mxu0 0
    %279 = vmatprep.subr.bf16.mxu0 0
    %280 = vmatpush2.bf16.msra.mxu0 0
    %281 = vmatprep.mubr.bf16.mxu0 0
    %282 = vmatmul.mubr.bf16.gmra.mxu0 %v247
    %v283 = vpop.f32.mrf.mxu0
    %v284 = vadd.f32 0.0, %v283
    %v285 = vpop.f32.mrf.mxu0
    %v286 = vpop.f32.mrf.mxu0
    %v287 = vpop.f32.mrf.mxu0
    %288 = vdwg.mxu0
    %v289 = vmul.f32 %v284, 0.5
    %v290 = vtanh.pop %v289
    %v291 = vmul.f32 %v290, 0.5
    %v292 = vadd.f32 %v291, 0.5
    %v293 = vmul.f32 %v284, %v292
    %v294 = vpack.c.bf16 %v293, %v293
    %v295 = vld [vmem:[#allocation10] sm:$0xf]
    %v296 = vld [vmem:[#allocation10 + $0x4] sm:$0xf]
    %v297 = vld [vmem:[#allocation10 + $0x8] sm:$0xf]
    %v298 = vld [vmem:[#allocation10 + $0xc] sm:$0xf]
    %v303 = vunpack.c.l.b16 %v295
    %v304 = vunpack.c.l.b16 %v296
    %v305 = vunpack.c.l.b16 %v297
    %v306 = vunpack.c.l.b16 %v298
    %v307 = vpack.c.b16 %v304, %v303
    %v308 = vpack.c.b16 %v306, %v305
    %v312 = vsel %vm180, %v294, 0
    %314 = vmatprep.subr.bf16.mxu0 0
    %315 = vmatpush1.bf16.msra.mxu0 0
    %316 = vmatprep.subr.bf16.mxu0 0
    %317 = vmatpush1.bf16.msra.mxu0 0
    %318 = vmatprep.subr.bf16.mxu0 0
    %319 = vmatpush1.bf16.msra.mxu0 0
    %320 = vmatprep.subr.bf16.mxu0 0
    %321 = vmatpush1.bf16.msra.mxu0 0
    %322 = vmatprep.subr.bf16.mxu0 0
    %323 = vmatpush1.bf16.msra.mxu0 0
    %324 = vmatprep.subr.bf16.mxu0 0
    %325 = vmatpush1.bf16.msra.mxu0 0
    %326 = vmatprep.subr.bf16.mxu0 0
    %327 = vmatpush1.bf16.msra.mxu0 %v308
    %328 = vmatprep.subr.bf16.mxu0 0
    %329 = vmatpush1.bf16.msra.mxu0 %v307
    %330 = vmatprep.subr.bf16.mxu0 0
    %331 = vmatpush2.bf16.msra.mxu0 0
    %332 = vmatprep.subr.bf16.mxu0 0
    %333 = vmatpush2.bf16.msra.mxu0 0
    %334 = vmatprep.subr.bf16.mxu0 0
    %335 = vmatpush2.bf16.msra.mxu0 0
    %336 = vmatprep.subr.bf16.mxu0 0
    %337 = vmatpush2.bf16.msra.mxu0 0
    %338 = vmatprep.subr.bf16.mxu0 0
    %339 = vmatpush2.bf16.msra.mxu0 0
    %340 = vmatprep.subr.bf16.mxu0 0
    %341 = vmatpush2.bf16.msra.mxu0 0
    %342 = vmatprep.subr.bf16.mxu0 0
    %343 = vmatpush2.bf16.msra.mxu0 0
    %344 = vmatprep.subr.bf16.mxu0 0
    %345 = vmatpush2.bf16.msra.mxu0 0
    %346 = vmatprep.mubr.bf16.mxu0 0
    %347 = vmatmul.mubr.bf16.gmra.mxu0 %v312
    %v348 = vpop.f32.mrf.mxu0
    %v349 = vadd.f32 0.0, %v348
    %v350 = vpop.f32.mrf.mxu0
    %v351 = vpop.f32.mrf.mxu0
    %v352 = vpop.f32.mrf.mxu0
    %353 = vdwg.mxu0
    %v354 = vmul.f32 %v349, 0.5
    %v355 = vtanh.pop %v354
    %v356 = vmul.f32 %v355, 0.5
    %v357 = vadd.f32 %v356, 0.5
    %v358 = vmul.f32 %v349, %v357
    %v359 = vpack.c.bf16 %v358, %v358
    %v360 = vld [vmem:[#allocation11] sm:$0xf]
    %v361 = vld [vmem:[#allocation11 + $0x4] sm:$0xf]
    %v362 = vld [vmem:[#allocation11 + $0x8] sm:$0xf]
    %v363 = vld [vmem:[#allocation11 + $0xc] sm:$0xf]
    %v368 = vunpack.c.l.b16 %v360
    %v369 = vunpack.c.l.b16 %v361
    %v370 = vunpack.c.l.b16 %v362
    %v371 = vunpack.c.l.b16 %v363
    %v372 = vpack.c.b16 %v369, %v368
    %v373 = vpack.c.b16 %v371, %v370
    %v377 = vsel %vm180, %v359, 0
    %379 = vmatprep.subr.bf16.mxu0 0
    %380 = vmatpush1.bf16.msra.mxu0 0
    %381 = vmatprep.subr.bf16.mxu0 0
    %382 = vmatpush1.bf16.msra.mxu0 0
    %383 = vmatprep.subr.bf16.mxu0 0
    %384 = vmatpush1.bf16.msra.mxu0 0
    %385 = vmatprep.subr.bf16.mxu0 0
    %386 = vmatpush1.bf16.msra.mxu0 0
    %387 = vmatprep.subr.bf16.mxu0 0
    %388 = vmatpush1.bf16.msra.mxu0 0
    %389 = vmatprep.subr.bf16.mxu0 0
    %390 = vmatpush1.bf16.msra.mxu0 0
    %391 = vmatprep.subr.bf16.mxu0 0
    %392 = vmatpush1.bf16.msra.mxu0 %v373
    %393 = vmatprep.subr.bf16.mxu0 0
    %394 = vmatpush1.bf16.msra.mxu0 %v372
    %395 = vmatprep.subr.bf16.mxu0 0
    %396 = vmatpush2.bf16.msra.mxu0 0
    %397 = vmatprep.subr.bf16.mxu0 0
    %398 = vmatpush2.bf16.msra.mxu0 0
    %399 = vmatprep.subr.bf16.mxu0 0
    %400 = vmatpush2.bf16.msra.mxu0 0
    %401 = vmatprep.subr.bf16.mxu0 0
    %402 = vmatpush2.bf16.msra.mxu0 0
    %403 = vmatprep.subr.bf16.mxu0 0
    %404 = vmatpush2.bf16.msra.mxu0 0
    %405 = vmatprep.subr.bf16.mxu0 0
    %406 = vmatpush2.bf16.msra.mxu0 0
    %407 = vmatprep.subr.bf16.mxu0 0
    %408 = vmatpush2.bf16.msra.mxu0 0
    %409 = vmatprep.subr.bf16.mxu0 0
    %410 = vmatpush2.bf16.msra.mxu0 0
    %411 = vmatprep.mubr.bf16.mxu0 0
    %412 = vmatmul.mubr.bf16.gmra.mxu0 %v377
    %v413 = vpop.f32.mrf.mxu0
    %v414 = vadd.f32 0.0, %v413
    %v415 = vpop.f32.mrf.mxu0
    %v416 = vpop.f32.mrf.mxu0
    %v417 = vpop.f32.mrf.mxu0
    %418 = vdwg.mxu0
    %v419 = vlaneseq
    %v420 = vand.u32 %v419, 127
    %vm421 = vcmp.lt.s32.totalorder %v420, 8
    %v422 = vsel %vm421, %v414, -inf
    %423 = vmax.xlane.f32.xlu0 %v422
    %v424 = vpop.xlane.xlu0 %423
    %v425 = vsub.f32 %v422, %v424
    %v426 = vmul.f32 %v425, 1.442695
    %v427 = vpow.pop %v426
    %428 = vadd.xlane.f32.xlu0 %v427
    %v429 = vpop.xlane.xlu0 %428
    %v430 = vrcp.pop %v429
    %v431 = vmul.f32 %v427, %v430
    %432 = vst [vmem:[#allocation13] sm:$0xff] %v431
    // Predicated region
    $region50: #{tpu_custom_call.1} parent=1 // pred_check
      _
    $region51: #{tpu_custom_call.1} parent=1 // pred_check_branch
      %434 = sbr.rel (0) target = $region53
    $region52: #{tpu_custom_call.1} parent=1 // pred_region
      %s436 = ssub.s32 128, 128
      %437 = vsyncadd [#allocation4], %s436
      %s439 = sshll.u32 [#allocation13], 4
      %s440 = int_to_ptr.vmem [resolvable:$true] %s439
      %442 = dma.vmem_to_hbm [thread:$0]  %s440, 128, %s6, [#allocation4]
    $region53: #{tpu_custom_call.1} parent=1 // pred_fallthru
      _
    // Predicated region
    $region54: #{tpu_custom_call.1} parent=1 // pred_check
      _
    $region55: #{tpu_custom_call.1} parent=1 // pred_check_branch
      %444 = sbr.rel (0) target = $region57
    $region56: #{tpu_custom_call.1} parent=1 // pred_region
      %445 = dma.done [#allocation4], 128
    $region57: #{tpu_custom_call.1} parent=1 // pred_fallthru
      _
    %446 = vsyncpa [#allocation3], 1
    %447 = vsyncpa [#allocation6], 1
    %448 = vsyncpa [#allocation9], 1
    %449 = vsyncpa [#allocation12], 1
    %450 = vsyncpa [#allocation4], 1

</llo_original>
